<compile_context>
chip_gen: v7x
topology: tpu7x:2x2x1
jax: 0.10.0
libtpu: 0.0.40
codegen_flags: <defaults>
</compile_context>

<pallas_src>
import functools

import jax
import jax.numpy as jnp
from jax.experimental import pallas as pl
from jax.experimental.pallas import tpu as pltpu

IGNORE_INDEX = -1

_VMEM_LIMIT_BYTES = 32 * 1024 * 1024   # < 64 MiB physical on v7x; ample elsewhere
_PROBS_BUF_BYTES = 12 * 1024 * 1024    # budget for ONE probs buffer (x2 double-buffered)


def _choose_tile_rows(n_rows, n_classes, itemsize):
    """Row tile: multiple of 8, ~12 MiB per probs buffer, and >=2 grid blocks.

    Returns (tile_rows, budget_rows); budget_rows is the pre-clamp tile the
    VMEM budget alone would allow (used to decide on deeper pipelining).
    """
    budget_rows = _PROBS_BUF_BYTES // (n_classes * itemsize)
    budget_rows = max(8, (int(budget_rows) // 8) * 8)
    # Clamp so the grid has at least 2 blocks when possible -> both v7x TCs
    # get work under the "parallel" dimension semantics.
    half_rows = ((pl.cdiv(n_rows, 2) + 7) // 8) * 8
    tr = min(budget_rows, half_rows)
    tr = max(8, (tr // 8) * 8)
    return tr, budget_rows


def _ce_rows_kernel(probs_ref, tgt_ref, loss_ref, *, n_rows, tile_rows):
    """One grid step: TILE_ROWS rows x C classes -> one block partial loss sum.

    per_row = log(sum_j p_j) - log(p_target)   (== logsumexp(log p) - log p[t])
    Rows with target == IGNORE_INDEX or beyond the true row count contribute 0.
    The block's loss sum is written lane-dense into lane 0 of a (1,1,128) slab.
    """
    p = probs_ref[...]                                            # (TR, C) native dtype
    tgt = tgt_ref[...]                                            # (TR, 1) int32

    # Mask rows of the (possibly partially out-of-bounds) last block and
    # ignore_index rows.
    row = (pl.program_id(0) * tile_rows
           + jax.lax.broadcasted_iota(jnp.int32, (tile_rows, 1), 0))
    valid = jnp.logical_and(tgt != IGNORE_INDEX, row < n_rows)    # (TR, 1)

    # One cross-lane sum of raw probabilities + one one-hot pick; the select
    # stays in the native dtype, the reductions accumulate in f32.
    col = jax.lax.broadcasted_iota(jnp.int32, p.shape, 1)         # (TR, C)
    picked = jnp.sum(jnp.where(col == tgt, p, jnp.zeros((), p.dtype)),
                     axis=-1, keepdims=True, dtype=jnp.float32)   # (TR, 1)
    sum_p = jnp.sum(p, axis=-1, keepdims=True, dtype=jnp.float32)  # (TR, 1)

    # Only 2 EUP logs per row.
    per_row = jnp.where(valid, jnp.log(sum_p) - jnp.log(picked), 0.0)

    # Block-level partial sum (XLU sublane reduction), stored lane-dense.
    blk_loss = jnp.sum(per_row, axis=0, keepdims=True)            # (1, 1)
    lane = jax.lax.broadcasted_iota(jnp.int32, (1, 1, 128), 2)
    loss_ref[...] = jnp.where(lane == 0, blk_loss[None, :, :], 0.0)


def _ce_sum_count(probs, target):
    """Sum of per-row CE (ignoring IGNORE_INDEX rows) and the valid-row count.

    probs : (R, C) probabilities in their native dtype (f32 / bf16)
    target: (R,)   int class ids; IGNORE_INDEX rows are skipped
    Returns (loss_sum, valid_count) as float32 scalars.
    """
    R, C = probs.shape
    tr, budget_rows = _choose_tile_rows(R, C, probs.dtype.itemsize)
    n_blocks = pl.cdiv(R, tr)

    tgt2 = target.astype(jnp.int32).reshape(R, 1)
    kernel = functools.partial(_ce_rows_kernel, n_rows=R, tile_rows=tr)

    # TODO(synk): for LLM-scale vocabularies (C * itemsize * 8 rows approaching
    # the VMEM limit) add an inner "arbitrary" class-tile grid axis with VMEM
    # scratch accumulators for sum_p / picked instead of 8-row full-C blocks.
    if budget_rows <= 16:
        # Huge C collapsed the row tile: deepen pipelining to hide DMA issue
        # latency of the small blocks.
        probs_spec = pl.BlockSpec((tr, C), lambda i: (i, 0),
                                  pipeline_mode=pl.Buffered(3))
    else:
        probs_spec = pl.BlockSpec((tr, C), lambda i: (i, 0))

    partials = pl.pallas_call(
        kernel,
        out_shape=jax.ShapeDtypeStruct((n_blocks, 1, 128), jnp.float32),
        grid_spec=pltpu.PrefetchScalarGridSpec(
            num_scalar_prefetch=0,
            grid=(n_blocks,),
            in_specs=[
                probs_spec,
                pl.BlockSpec((tr, 1), lambda i: (i, 0)),
            ],
            out_specs=pl.BlockSpec((1, 1, 128), lambda i: (i, 0, 0)),
        ),
        compiler_params=pltpu.CompilerParams(
            dimension_semantics=("parallel",),
            vmem_limit_bytes=_VMEM_LIMIT_BYTES),
    )(probs, tgt2)

    # Only lane 0 of each block slab is nonzero -> summing everything is exact.
    loss_sum = jnp.sum(partials)
    # Valid-row count needs no kernel work: it only depends on the tiny target
    # array (all R rows passed in are "in range" by construction).
    valid_count = jnp.sum((target != IGNORE_INDEX).astype(jnp.float32))
    return loss_sum, valid_count


def ce_loss_total(outputs, targets):
    """JAX/Pallas equivalent of CELossTotal.forward.

    outputs: tuple of two (N, L, C) probability tensors
    targets: tuple of two (N, L) integer tensors
    """
    o_shift, o_plain = outputs
    t_shift, t_plain = targets

    # --- CELossShift(output[0], target[0]) ---------------------------------
    # Instead of materializing output[:, :-1, :] (a near-full HBM copy of the
    # big probability tensor), stream the FULL tensor and shift/mask the tiny
    # target array: row (n, i) pairs with target (n, i+1); the last row and
    # any position >= 249 become IGNORE_INDEX (reproduces target[:, 1:][:, :249]).
    N0, L0, C0 = o_shift.shape
    t0 = jnp.concatenate(
        [t_shift[:, 1:].astype(jnp.int32),
         jnp.full((N0, 1), IGNORE_INDEX, jnp.int32)], axis=1)        # (N0, L0)
    pos0 = jnp.arange(L0, dtype=jnp.int32)[None, :]
    t0 = jnp.where(pos0 < 249, t0, IGNORE_INDEX)
    s0, c0 = _ce_sum_count(o_shift.reshape(-1, C0), t0.reshape(-1))

    # --- CELoss(output[1], target[1]) ---------------------------------------
    N1, L1, C1 = o_plain.shape
    t1 = t_plain.astype(jnp.int32)
    pos1 = jnp.arange(L1, dtype=jnp.int32)[None, :]
    t1 = jnp.where(pos1 < 249, t1, IGNORE_INDEX)                     # target[:, :249]
    s1, c1 = _ce_sum_count(o_plain.reshape(-1, C1), t1.reshape(-1))

    return s0 / c0 + s1 / c1


if __name__ == "__main__":
    key = jax.random.PRNGKey(0)
    N, L, C = 2, 8, 32   # small shapes; L <= 249 so the :249 slice is a no-op

    k0, k1, k2, k3 = jax.random.split(key, 4)

    # probabilities (the module takes softmax outputs and applies log itself)
    probs0 = jax.nn.softmax(jax.random.normal(k0, (N, L, C), jnp.float32), -1)
    probs1 = jax.nn.softmax(jax.random.normal(k1, (N, L, C), jnp.float32), -1)

    tgt0 = jax.random.randint(k2, (N, L), 0, C, jnp.int32)
    tgt1 = jax.random.randint(k3, (N, L), 0, C, jnp.int32)
    # sprinkle in some ignore_index entries to exercise the mask
    tgt0 = tgt0.at[0, 3].set(IGNORE_INDEX)
    tgt1 = tgt1.at[1, 5].set(IGNORE_INDEX)

    loss = ce_loss_total((probs0, probs1), (tgt0, tgt1))
    loss = jax.block_until_ready(loss)

    # reference check in plain JAX (same math as the PyTorch spec, no Pallas)
    def ref_ce(p, t):
        logits = jnp.log(p.reshape(-1, p.shape[-1]))
        t = t.reshape(-1)
        logz = jax.scipy.special.logsumexp(logits, axis=-1)
        pick = jnp.take_along_axis(
            logits, jnp.clip(t, 0, None)[:, None], axis=-1)[:, 0]
        valid = t != IGNORE_INDEX
        return jnp.sum(jnp.where(valid, logz - pick, 0.0)) / jnp.sum(valid)

    ref = ref_ce(probs0[:, :-1, :], tgt0[:, 1:]) + ref_ce(probs1, tgt1)
    assert jnp.allclose(loss, ref, rtol=1e-4, atol=1e-4), (loss, ref)

    print("KERNEL_OK")
</pallas_src>

<mosaic_0001>
module attributes {stable_mosaic.version = 11 : i64} {
  func.func @_ce_rows_kernel(%arg0: i32, %arg1: memref<8x32xf32, #tpu.memory_space<vmem>>, %arg2: memref<8x1xi32, #tpu.memory_space<vmem>>, %arg3: memref<1x1x128xf32, #tpu.memory_space<vmem>>) attributes {dimension_semantics = [#tpu.dimension_semantics<parallel>], iteration_bounds = array<i64: 2>, scalar_prefetch = 0 : i64, scratch_operands = 0 : i64, tpu.core_type = #tpu.core_type<tc>, window_params = [{transform_indices = @transform_0, window_bounds = array<i64: 8, 32>}, {transform_indices = @transform_1, window_bounds = array<i64: 8, 1>}, {transform_indices = @transform_2, window_bounds = array<i64: 1, 1, 128>}]} {
    %c0 = arith.constant 0 : index
    %c0_0 = arith.constant 0 : index
    %0 = vector.load %arg1[%c0, %c0_0] : memref<8x32xf32, #tpu.memory_space<vmem>>, vector<8x32xf32>
    %c0_1 = arith.constant 0 : index
    %c0_2 = arith.constant 0 : index
    %1 = vector.load %arg2[%c0_1, %c0_2] : memref<8x1xi32, #tpu.memory_space<vmem>>, vector<8x1xi32>
    %c8_i32 = arith.constant 8 : i32
    %2 = arith.muli %arg0, %c8_i32 : i32
    %3 = tpu.iota {dimensions = array<i32: 0>} : vector<8x1xi32>
    %4 = vector.broadcast %2 : i32 to vector<8x1xi32>
    %5 = arith.addi %4, %3 : vector<8x1xi32>
    %c-1_i32 = arith.constant -1 : i32
    %6 = vector.broadcast %c-1_i32 : i32 to vector<8x1xi32>
    %7 = arith.cmpi ne, %1, %6 : vector<8x1xi32>
    %c16_i32 = arith.constant 16 : i32
    %8 = vector.broadcast %c16_i32 : i32 to vector<8x1xi32>
    %9 = arith.cmpi slt, %5, %8 : vector<8x1xi32>
    %10 = arith.andi %7, %9 : vector<8x1xi1>
    %11 = tpu.iota {dimensions = array<i32: 1>} : vector<8x32xi32>
    %12 = vector.broadcast %1 : vector<8x1xi32> to vector<8x32xi32>
    %13 = arith.cmpi eq, %11, %12 : vector<8x32xi32>
    %cst = arith.constant 0.000000e+00 : f32
    %14 = vector.broadcast %cst : f32 to vector<8x32xf32>
    %15 = arith.select %13, %0, %14 : vector<8x32xi1>, vector<8x32xf32>
    %cst_3 = arith.constant dense<0.000000e+00> : vector<8xf32>
    %16 = vector.multi_reduction <add>, %15, %cst_3 [1] : vector<8x32xf32> to vector<8xf32>
    %17 = vector.shape_cast %16 : vector<8xf32> to vector<8x1xf32>
    %cst_4 = arith.constant dense<0.000000e+00> : vector<8xf32>
    %18 = vector.multi_reduction <add>, %0, %cst_4 [1] : vector<8x32xf32> to vector<8xf32>
    %19 = vector.shape_cast %18 : vector<8xf32> to vector<8x1xf32>
    %20 = math.log %19 : vector<8x1xf32>
    %21 = math.log %17 : vector<8x1xf32>
    %22 = arith.subf %20, %21 : vector<8x1xf32>
    %cst_5 = arith.constant 0.000000e+00 : f32
    %23 = vector.broadcast %cst_5 : f32 to vector<8x1xf32>
    %24 = arith.select %10, %22, %23 : vector<8x1xi1>, vector<8x1xf32>
    %cst_6 = arith.constant dense<0.000000e+00> : vector<1xf32>
    %25 = vector.multi_reduction <add>, %24, %cst_6 [0] : vector<8x1xf32> to vector<1xf32>
    %26 = vector.shape_cast %25 : vector<1xf32> to vector<1x1xf32>
    %27 = tpu.iota {dimensions = array<i32: 2>} : vector<1x1x128xi32>
    %c0_i32 = arith.constant 0 : i32
    %28 = vector.broadcast %c0_i32 : i32 to vector<1x1x128xi32>
    %29 = arith.cmpi eq, %27, %28 : vector<1x1x128xi32>
    %30 = vector.shape_cast %26 : vector<1x1xf32> to vector<1x1x1xf32>
    %cst_7 = arith.constant 0.000000e+00 : f32
    %31 = vector.shape_cast %30 : vector<1x1x1xf32> to vector<1x1x1xf32>
    %32 = vector.broadcast %31 : vector<1x1x1xf32> to vector<1x1x128xf32>
    %33 = vector.broadcast %cst_7 : f32 to vector<1x1x128xf32>
    %34 = arith.select %29, %32, %33 : vector<1x1x128xi1>, vector<1x1x128xf32>
    %c0_8 = arith.constant 0 : index
    %c0_9 = arith.constant 0 : index
    %c0_10 = arith.constant 0 : index
    %35 = vector.load %arg3[%c0_8, %c0_9, %c0_10] : memref<1x1x128xf32, #tpu.memory_space<vmem>>, vector<1x1x128xf32>
    tpu.vector_store %arg3[%c0_8, %c0_9, %c0_10], %34 {strides = array<i32>} : memref<1x1x128xf32, #tpu.memory_space<vmem>>, vector<1x1x128xf32>,
    return
  }
  func.func @transform_0(%arg0: i32) -> (i32, i32) {
    %c0_i32 = arith.constant 0 : i32
    %c0_i32_0 = arith.constant 0 : i32
    return %arg0, %c0_i32 : i32, i32
  }
  func.func @transform_1(%arg0: i32) -> (i32, i32) {
    %c0_i32 = arith.constant 0 : i32
    %c0_i32_0 = arith.constant 0 : i32
    return %arg0, %c0_i32 : i32, i32
  }
  func.func @transform_2(%arg0: i32) -> (i32, i32, i32) {
    %c0_i32 = arith.constant 0 : i32
    %c0_i32_0 = arith.constant 0 : i32
    %c0_i32_1 = arith.constant 0 : i32
    return %arg0, %c0_i32, %c0_i32_0 : i32, i32, i32
  }
}

</mosaic_0001>

<llo_original>
// kernel: tpu_custom_call.1
$region0: #{tpu_custom_call.1}
  #allocation0 [shape = 'u32[]', space=smem, size = 0x4, offset = 0x4, fixed_abs, tag = 'smem constant byte address 0x4 - core index']
  #allocation1 [shape = 'u32[144,128]{1,0:T(1,128)}', space=vmem, size = 0x12000, scoped, tag = 'internal scratch']
  %s0 = inlined_call_operand.vmem [shape: f32[16,32], index: 0, kind: input, shape index: {}]
  %s1 = inlined_call_operand.vmem [shape: s32[16,1], index: 1, kind: input, shape index: {}]
  %s2 = inlined_call_operand.hbm [shape: f32[2,1,128], index: 2, kind: output, shape index: {}]
  %s3 = sld [smem:[#allocation0]]
  $region41: #{tpu_custom_call.1} parent=0
    _
  %s5 = ssub.s32 1, %s3
  %s6 = scalar_select 0, %s5, %s3
  $region1: #{tpu_custom_call.1} parent=0
    #allocation2 [shape = 'u8[1024]{0}', space=vmem, size = 0x400, scoped, tag = 'output window, operand 0']
    #allocation3 [shape = 's32[2]{0}', space=sflag, size = 0x8, scoped, tag = 'scoped memory for tpu_custom_call.1']
    %7 = vsyncpa [#allocation3], 0
    %s8 = scalar_lea.sflag [#allocation3], 1
    %9 = vsyncpa %s8, 0
    loop: start=0, step=1, limit=4
    $region2: #{tpu_custom_call.1} parent=1 // loop_pre_header
      _
    $region3: #{tpu_custom_call.1} parent=1 // loop_header
      %s11 = sphi 0, %s15
      %p12 = scmp.ge.s32.totalorder %s11, 4
      %s21 = sphi 0, %s23
      %s24 = sphi 0, %s21
      %s25 = sphi 0, %s24
      %s41 = sphi 0, %s25
      %s47 = sphi 0, %s49
      %s50 = sphi 0, %s47
      %s51 = sphi 0, %s50
      %s67 = sphi 0, %s51
      %s73 = sphi 0, %s75
      %s76 = sphi 0, %s73
      %s77 = sphi 0, %s76
      %s93 = sphi 0, %s77
    $region4: #{tpu_custom_call.1} parent=1 // loop_header_branch
      %14 = sbr.rel (%p12) target = $region8
    $region5: #{tpu_custom_call.1} parent=1 // loop_body
      %s16 = ssub.s32 %s11, 1
      %s17 = ssub.s32 %s11, 2
      %s18 = sadd.s32 %s11, 1
      %s19 = ssub.s32 %s11, %s18
      %p20 = scmp.eq.s32.totalorder %s19, 0
      %s22 = sadd.s32 %s21, 1
      %s23 = scalar_select %p20, %s21, %s22
      %p26 = pneg %p20
      %p27 = scmp.eq.s32.totalorder %s11, 1
      %p28 = por %p26, %p27
      %p29 = scmp.ne.s32.totalorder %s21, %s24
      %p30 = scmp.eq.s32.totalorder %s11, 0
      %p31 = por %p29, %p30
      %p32 = scmp.ne.s32.totalorder %s21, %s24
      %p33 = scmp.eq.s32.totalorder %s16, 1
      %p34 = por %p32, %p33
      %p35 = scmp.ne.s32.totalorder %s24, %s25
      %p36 = scmp.eq.s32.totalorder %s16, 0
      %p37 = por %p35, %p36
      %p38 = scmp.ne.s32.totalorder %s24, %s25
      %p39 = scmp.eq.s32.totalorder %s17, 1
      %p40 = por %p38, %p39
      %p42 = scmp.ne.s32.totalorder %s25, %s41
      %p43 = scmp.eq.s32.totalorder %s17, 0
      %p44 = por %p42, %p43
      %s45 = ssub.s32 %s11, %s18
      %p46 = scmp.eq.s32.totalorder %s45, 0
      %s48 = sadd.s32 %s47, 1
      %s49 = scalar_select %p46, %s47, %s48
      %p52 = pneg %p46
      %p53 = scmp.eq.s32.totalorder %s11, 1
      %p54 = por %p52, %p53
      %p55 = scmp.ne.s32.totalorder %s47, %s50
      %p56 = scmp.eq.s32.totalorder %s11, 0
      %p57 = por %p55, %p56
      %p58 = scmp.ne.s32.totalorder %s47, %s50
      %p59 = scmp.eq.s32.totalorder %s16, 1
      %p60 = por %p58, %p59
      %p61 = scmp.ne.s32.totalorder %s50, %s51
      %p62 = scmp.eq.s32.totalorder %s16, 0
      %p63 = por %p61, %p62
      %p64 = scmp.ne.s32.totalorder %s50, %s51
      %p65 = scmp.eq.s32.totalorder %s17, 1
      %p66 = por %p64, %p65
      %p68 = scmp.ne.s32.totalorder %s51, %s67
      %p69 = scmp.eq.s32.totalorder %s17, 0
      %p70 = por %p68, %p69
      %s71 = ssub.s32 %s11, %s18
      %p72 = scmp.eq.s32.totalorder %s71, 0
      %s74 = sadd.s32 %s73, 1
      %s75 = scalar_select %p72, %s73, %s74
      %p78 = pneg %p72
      %p79 = scmp.eq.s32.totalorder %s11, 1
      %p80 = por %p78, %p79
      %p81 = scmp.ne.s32.totalorder %s73, %s76
      %p82 = scmp.eq.s32.totalorder %s11, 0
      %p83 = por %p81, %p82
      %p84 = scmp.ne.s32.totalorder %s73, %s76
      %p85 = scmp.eq.s32.totalorder %s16, 1
      %p86 = por %p84, %p85
      %p87 = scmp.ne.s32.totalorder %s76, %s77
      %p88 = scmp.eq.s32.totalorder %s16, 0
      %p89 = por %p87, %p88
      %p90 = scmp.ne.s32.totalorder %s76, %s77
      %p91 = scmp.eq.s32.totalorder %s17, 1
      %p92 = por %p90, %p91
      %p94 = scmp.ne.s32.totalorder %s77, %s93
      %p95 = scmp.eq.s32.totalorder %s17, 0
      %p96 = por %p94, %p95
      %p97 = scmp.le.s32.totalorder 1, %s11
      %p98 = scmp.lt.s32.totalorder %s11, 3
      %p99 = pnand %p97, %p98
      %p100 = pneg %p99
      // Predicated region
      $region9: #{tpu_custom_call.1} parent=5 // pred_check
        _
      $region10: #{tpu_custom_call.1} parent=5 // pred_check_branch
        %102 = sbr.rel (%p99) target = $region12
      $region11: #{tpu_custom_call.1} parent=5 // pred_region
        %s103 = ssub.s32 %s11, 1
      $region12: #{tpu_custom_call.1} parent=5 // pred_fallthru
        _
      %p104 = scmp.lt.s32.totalorder %s11, 2
      // Predicated region
      $region13: #{tpu_custom_call.1} parent=5 // pred_check
        %p105 = pneg %p104
      $region14: #{tpu_custom_call.1} parent=5 // pred_check_branch
        %107 = sbr.rel (%p105) target = $region16
      $region15: #{tpu_custom_call.1} parent=5 // pred_region
        // Predicated region
        $region17: #{tpu_custom_call.1} parent=15 // pred_check
          %p108 = pneg %p31
        $region18: #{tpu_custom_call.1} parent=15 // pred_check_branch
          %110 = sbr.rel (%p108) target = $region20
        $region19: #{tpu_custom_call.1} parent=15 // pred_region
          %p111 = scmp.lt.s32.totalorder %s11, 1
          %s112 = scalar_select %p111, %s11, 1
          %s113 = smul.addr %s112, 8
          %s114 = scalar_lea.vmem %s0, %s113
        $region20: #{tpu_custom_call.1} parent=15 // pred_fallthru
          _
        // Predicated region
        $region21: #{tpu_custom_call.1} parent=15 // pred_check
          %p115 = pneg %p57
        $region22: #{tpu_custom_call.1} parent=15 // pred_check_branch
          %117 = sbr.rel (%p115) target = $region24
        $region23: #{tpu_custom_call.1} parent=15 // pred_region
          %p118 = scmp.lt.s32.totalorder %s11, 1
          %s119 = scalar_select %p118, %s11, 1
          %s120 = smul.addr %s119, 8
          %s121 = scalar_lea.vmem %s1, %s120
        $region24: #{tpu_custom_call.1} parent=15 // pred_fallthru
          _
      $region16: #{tpu_custom_call.1} parent=5 // pred_fallthru
        _
      %p122 = scmp.le.s32.totalorder 1, %s11
      %p123 = scmp.lt.s32.totalorder %s11, 3
      %p124 = pnand %p122, %p123
      %p125 = pneg %p124
      // Predicated region
      $region25: #{tpu_custom_call.1} parent=5 // pred_check
        _
      $region26: #{tpu_custom_call.1} parent=5 // pred_check_branch
        %127 = sbr.rel (%p124) target = $region28
      $region27: #{tpu_custom_call.1} parent=5 // pred_region
        %s128 = ssub.s32 %s11, 1
        %p129 = scmp.lt.s32.totalorder %s16, 1
        %s130 = scalar_select %p129, %s16, 1
        %s131 = smul.addr %s130, 8
        %s132 = scalar_lea.vmem %s0, %s131
        %p133 = pneg %p37
        %p134 = pneg %p34
        %p135 = scmp.lt.s32.totalorder %s16, 1
        %s136 = scalar_select %p135, %s16, 1
        %s137 = smul.addr %s136, 8
        %s138 = scalar_lea.vmem %s1, %s137
        %p139 = pneg %p63
        %p140 = pneg %p60
        %p141 = pneg %p89
        %p142 = pneg %p86
        %s143 = sand.u32 %s76, 1
        %s144 = scalar_lea.sflag [#allocation3], %s143
        %s145 = sand.u32 %s76, 1
        %s146 = scalar_lea.vmem [#allocation2], %s145
        %p147 = scmp.lt.s32.totalorder %s16, 1
        %s148 = scalar_select %p147, %s16, 1
        %s149 = smul.addr %s148, 8
        %s150 = scalar_lea.vmem %s0, %s149
        %p151 = scmp.lt.s32.totalorder %s16, 1
        %s152 = scalar_select %p151, %s16, 1
        %s153 = smul.addr %s152, 8
        %s154 = scalar_lea.vmem %s1, %s153
        %v155 = vld [vmem:[%s150] sm:$0xff]
        %v156 = vld [vmem:[%s154] sm:$0xff]
        %s157 = smul.u32 %s16, 8
        %v158 = vlaneseq
        %v159 = vshrl.u32 %v158, 7
        %v160 = vstv %s157
        %v161 = vadd.s32 %v160, %v159
        %vm162 = vcmp.ne.s32.totalorder %v156, 4294967295
        %vm163 = vcmp.lt.s32.totalorder %v161, 16
        %vm164 = vmand %vm162, %vm163
        %v165 = vlaneseq
        %v166 = vand.u32 %v165, 127
        %167 = vset.pattern.permute.xlu0 0
        %168 = vperm.xlu0 %167, %v156
        %v169 = vpop.permute.xlu0 %168
        %vm170 = vcmp.eq.s32.totalorder %v166, %v169
        %v171 = vsel %vm170, %v155, 0.0
        %vm172 = vcmask 261120
        %v173 = vsel %vm172, %v171, 0.0
        %174 = vadd.xlane.f32.xlu0 %v173
        %v175 = vpop.xlane.xlu0 %174
        %v176 = vsel %vm172, %v155, 0.0
        %177 = vadd.xlane.f32.xlu0 %v176
        %v178 = vpop.xlane.xlu0 %177
        %v179 = vlog2.pop %v178
        %v180 = vmul.f32 %v179, 0.6931472
        %v181 = vlog2.pop %v175
        %v182 = vmul.f32 %v181, 0.6931472
        %v183 = vsub.f32 %v180, %v182
        %v184 = vsel %vm164, %v183, 0.0
        %vm185 = vcmask 7168
        %v186 = vsel %vm185, %v184, 0.0
        %v187 = vrot.slane %v186, 4
        %v188 = vadd.f32 %v186, %v187
        %v189 = vrot.slane %v188, 2
        %v190 = vadd.f32 %v188, %v189
        %v191 = vrot.slane %v190, 1
        %v192 = vadd.f32 %v190, %v191
        %vm193 = vcmp.eq.s32.totalorder %v166, 0
        %195 = vset.pattern.permute.xlu0 0
        %196 = vperm.xlu0 %195, %v192
        %v197 = vpop.permute.xlu0 %196
        %v199 = vsel %vm193, %v197, 0.0
        %200 = vst [vmem:[%s146] sm:$0x1] %v199
        %s201 = sand.u32 %s76, 1
        %s202 = scalar_lea.sflag [#allocation3], %s201
        %s203 = sand.u32 %s76, 1
        %s204 = scalar_lea.vmem [#allocation2], %s203
        // Predicated region
        $region29: #{tpu_custom_call.1} parent=27 // pred_check
          %p205 = pneg %p86
        $region30: #{tpu_custom_call.1} parent=27 // pred_check_branch
          %207 = sbr.rel (%p205) target = $region32
        $region31: #{tpu_custom_call.1} parent=27 // pred_region
          %s209 = ssub.s32 16, 16
          %210 = vsyncadd %s202, %s209
          %s211 = smul.addr %s16, 16
          %s212 = scalar_lea.hbm %s2, %s211
          %s214 = sshll.u32 %s204, 4
          %s215 = int_to_ptr.vmem [resolvable:$true] %s214
          %217 = dma.vmem_to_hbm [thread:$0]  %s215, 16, %s212, %s202
        $region32: #{tpu_custom_call.1} parent=27 // pred_fallthru
          _
      $region28: #{tpu_custom_call.1} parent=5 // pred_fallthru
        _
      %p218 = scmp.le.s32.totalorder 2, %s11
      // Predicated region
      $region33: #{tpu_custom_call.1} parent=5 // pred_check
        %p219 = pneg %p218
      $region34: #{tpu_custom_call.1} parent=5 // pred_check_branch
        %221 = sbr.rel (%p219) target = $region36
      $region35: #{tpu_custom_call.1} parent=5 // pred_region
        %s222 = ssub.s32 %s11, 2
        // Predicated region
        $region37: #{tpu_custom_call.1} parent=35 // pred_check
          %p223 = pneg %p92
        $region38: #{tpu_custom_call.1} parent=35 // pred_check_branch
          %225 = sbr.rel (%p223) target = $region40
        $region39: #{tpu_custom_call.1} parent=35 // pred_region
          %s226 = sand.u32 %s77, 1
          %s227 = scalar_lea.sflag [#allocation3], %s226
          %s228 = sand.u32 %s77, 1
          %s229 = scalar_lea.vmem [#allocation2], %s228
          %230 = dma.done %s227, 16
        $region40: #{tpu_custom_call.1} parent=35 // pred_fallthru
          _
      $region36: #{tpu_custom_call.1} parent=5 // pred_fallthru
        _
    $region6: #{tpu_custom_call.1} parent=1 // loop_footer
      %s15 = sadd.s32 1, %s11
    $region7: #{tpu_custom_call.1} parent=1 // loop_footer_branch
      %10 = sbr.rel target = $region3
    $region8: #{tpu_custom_call.1} parent=1 // loop_exit
      _
    %231 = vsyncpa [#allocation3], 1
    %s232 = scalar_lea.sflag [#allocation3], 1
    %233 = vsyncpa %s232, 1

</llo_original>
